<compile_context>
chip_gen: v5e
topology: v5e:2x2
jax: 0.10.0
libtpu: 0.0.40
codegen_flags: <defaults>
</compile_context>

<pallas_src>
import jax
import jax.numpy as jnp
from jax.experimental import pallas as pl
from jax.experimental.pallas import tpu as pltpu


def _make_search_kernel(L, N):
    """Kernel over one BH tile. refs = (*v_rows, *a_ts, vals_ref, idx_ref).

    v_rows[l]: (N_j, TB)      -- row 0 of V_l, BH-tile on lanes
    a_ts[l]  : (N_j, N_k, TB) -- A_l transposed to (j, k, bh)
    vals_ref : (1, TB) float32
    idx_ref  : (1, TB) int32
    """

    def kernel(*refs):
        v_refs = refs[:L]
        a_refs = refs[L:2 * L]
        vals_ref, idx_ref = refs[2 * L], refs[2 * L + 1]

        acc = None  # running elementwise max over l, shape (N_k, TB), f32
        for l in range(L):  # L is small & static -> unrolled at trace time
            v = v_refs[l][...].astype(jnp.float32)      # (N_j, TB)
            a = a_refs[l][...].astype(jnp.float32)      # (N_j, N_k, TB)
            # prod[k, b] = sum_j V_l[b, 0, j] * A_l[b, j, k]   (pure VPU)
            prod = jnp.sum(v[:, None, :] * a, axis=0)   # (N_k, TB)
            acc = prod if acc is None else jnp.maximum(acc, prod)

        # last_map = new_w[:, :, 0, 1:]  ->  mask k == 0 instead of slicing.
        k_ids = jax.lax.broadcasted_iota(jnp.int32, acc.shape, 0)      # (N_k, TB)
        masked = jnp.where(k_ids == 0, jnp.float32(-jnp.inf), acc)
        m = jnp.max(masked, axis=0, keepdims=True)                     # (1, TB)
        vals_ref[...] = m
        # First-occurrence argmax (matches torch / jnp tie-breaking), shift by 1.
        # TODO(synk): all-NaN rows would diverge from torch argmax; finite
        # attention maps are assumed.
        first_k = jnp.min(
            jnp.where(masked == m, k_ids, jnp.int32(N)), axis=0, keepdims=True)
        idx_ref[...] = (first_k - 1).astype(jnp.int32)

    return kernel


def _choose_tile_bh(BH, N, L, itemsize):
    """Pick a lane-dense BH tile keeping double-buffered inputs well under VMEM."""
    if BH % 128 != 0:
        return BH  # small / irregular: single full block (allowed by the (8,128) rule)
    per_bh_bytes = 2 * L * (N * N + N) * itemsize      # 2 pipeline buffers per input
    budget = 24 * 1024 * 1024
    tile = (budget // max(per_bh_bytes, 1)) // 128 * 128
    tile = max(128, min(tile, BH))
    while BH % tile != 0:
        tile -= 128
    return tile


def search(weight_list_v, weight_list_a):
    """Pallas equivalent of Search.forward.

    Returns (max_values [B,H] float32, max_indices [B,H] int32)."""
    L = len(weight_list_v)
    assert L == len(weight_list_a) and L > 0
    B, H, N, N2 = weight_list_v[0].shape
    assert N == N2 and N >= 2
    BH = B * H
    dtype = weight_list_v[0].dtype
    itemsize = jnp.dtype(dtype).itemsize

    # Layout plumbing only (no compute): BH goes on the last (lane) axis.
    v_rows = []   # (N_j, BH)      row 0 of each V_l
    a_ts = []     # (N_j, N_k, BH)
    for wv, wa in zip(weight_list_v, weight_list_a):
        v_rows.append(jnp.transpose(wv[:, :, 0, :].reshape(BH, N), (1, 0)))
        a_ts.append(jnp.transpose(wa.reshape(BH, N, N), (1, 2, 0)))

    tile_bh = _choose_tile_bh(BH, N, L, itemsize)
    grid = (BH // tile_bh,)

    in_specs = (
        [pl.BlockSpec((N, tile_bh), lambda b: (0, b)) for _ in range(L)]
        + [pl.BlockSpec((N, N, tile_bh), lambda b: (0, 0, b)) for _ in range(L)]
    )
    out_specs = (
        pl.BlockSpec((1, tile_bh), lambda b: (0, b)),
        pl.BlockSpec((1, tile_bh), lambda b: (0, b)),
    )

    # Explicit scoped-VMEM budget: double-buffered inputs + outputs + headroom.
    est = 2 * L * (N * N + N) * tile_bh * itemsize     # inputs, 2 buffers each
    est += 2 * 2 * tile_bh * 4                         # outputs
    est += (L + 4) * N * tile_bh * 4                   # in-kernel f32 temporaries
    vmem_limit = int(min(64 * 2**20, max(32 * 2**20, 2 * est)))

    vals, idx = pl.pallas_call(
        _make_search_kernel(L, N),
        out_shape=(
            jax.ShapeDtypeStruct((1, BH), jnp.float32),
            jax.ShapeDtypeStruct((1, BH), jnp.int32),
        ),
        grid_spec=pltpu.PrefetchScalarGridSpec(
            num_scalar_prefetch=0,
            grid=grid,
            in_specs=in_specs,
            out_specs=out_specs,
        ),
        compiler_params=pltpu.CompilerParams(
            dimension_semantics=("parallel",),  # independent BH tiles (v7x megacore)
            vmem_limit_bytes=vmem_limit,
        ),
    )(*v_rows, *a_ts)

    return vals.reshape(B, H), idx.reshape(B, H)


def _reference(weight_list_v, weight_list_a):
    V = jnp.stack(weight_list_v, axis=0)
    A = jnp.stack(weight_list_a, axis=0)
    prods = jnp.einsum("lbhij,lbhjk->lbhik", V, A)
    new_w = jnp.max(prods, axis=0)
    last_map = new_w[:, :, 0, 1:]
    return jnp.max(last_map, axis=2), jnp.argmax(last_map, axis=2)


if __name__ == "__main__":
    B, H, N, L = 2, 4, 16, 3
    key = jax.random.PRNGKey(0)
    keys = jax.random.split(key, 2 * L)
    weight_list_v = [jax.random.normal(keys[i], (B, H, N, N), jnp.float32) for i in range(L)]
    weight_list_a = [jax.random.normal(keys[L + i], (B, H, N, N), jnp.float32) for i in range(L)]

    vals, idx = search(weight_list_v, weight_list_a)
    jax.block_until_ready((vals, idx))

    ref_vals, ref_idx = _reference(weight_list_v, weight_list_a)
    assert jnp.allclose(vals, ref_vals, atol=1e-4, rtol=1e-4), "value mismatch"
    assert jnp.array_equal(idx.astype(jnp.int32), ref_idx.astype(jnp.int32)), "index mismatch"

    print("KERNEL_OK")
</pallas_src>

<mosaic_0001>
module attributes {stable_mosaic.version = 11 : i64} {
  func.func @kernel(%arg0: i32, %arg1: memref<16x8xf32, #tpu.memory_space<vmem>>, %arg2: memref<16x8xf32, #tpu.memory_space<vmem>>, %arg3: memref<16x8xf32, #tpu.memory_space<vmem>>, %arg4: memref<16x16x8xf32, #tpu.memory_space<vmem>>, %arg5: memref<16x16x8xf32, #tpu.memory_space<vmem>>, %arg6: memref<16x16x8xf32, #tpu.memory_space<vmem>>, %arg7: memref<1x8xf32, #tpu.memory_space<vmem>>, %arg8: memref<1x8xi32, #tpu.memory_space<vmem>>) attributes {dimension_semantics = [#tpu.dimension_semantics<parallel>], iteration_bounds = array<i64: 1>, scalar_prefetch = 0 : i64, scratch_operands = 0 : i64, tpu.core_type = #tpu.core_type<tc>, window_params = [{transform_indices = @transform_0, window_bounds = array<i64: 16, 8>}, {transform_indices = @transform_1, window_bounds = array<i64: 16, 8>}, {transform_indices = @transform_2, window_bounds = array<i64: 16, 8>}, {transform_indices = @transform_3, window_bounds = array<i64: 16, 16, 8>}, {transform_indices = @transform_4, window_bounds = array<i64: 16, 16, 8>}, {transform_indices = @transform_5, window_bounds = array<i64: 16, 16, 8>}, {transform_indices = @transform_6, window_bounds = array<i64: 1, 8>}, {transform_indices = @transform_7, window_bounds = array<i64: 1, 8>}]} {
    %c0 = arith.constant 0 : index
    %c0_0 = arith.constant 0 : index
    %0 = vector.load %arg1[%c0, %c0_0] : memref<16x8xf32, #tpu.memory_space<vmem>>, vector<16x8xf32>
    %c0_1 = arith.constant 0 : index
    %c0_2 = arith.constant 0 : index
    %c0_3 = arith.constant 0 : index
    %1 = vector.load %arg4[%c0_1, %c0_2, %c0_3] : memref<16x16x8xf32, #tpu.memory_space<vmem>>, vector<16x16x8xf32>
    %2 = vector.shape_cast %0 : vector<16x8xf32> to vector<16x1x8xf32>
    %3 = vector.broadcast %2 : vector<16x1x8xf32> to vector<16x16x8xf32>
    %4 = arith.mulf %3, %1 : vector<16x16x8xf32>
    %cst = arith.constant dense<0.000000e+00> : vector<16x8xf32>
    %5 = vector.multi_reduction <add>, %4, %cst [0] : vector<16x16x8xf32> to vector<16x8xf32>
    %c0_4 = arith.constant 0 : index
    %c0_5 = arith.constant 0 : index
    %6 = vector.load %arg2[%c0_4, %c0_5] : memref<16x8xf32, #tpu.memory_space<vmem>>, vector<16x8xf32>
    %c0_6 = arith.constant 0 : index
    %c0_7 = arith.constant 0 : index
    %c0_8 = arith.constant 0 : index
    %7 = vector.load %arg5[%c0_6, %c0_7, %c0_8] : memref<16x16x8xf32, #tpu.memory_space<vmem>>, vector<16x16x8xf32>
    %8 = vector.shape_cast %6 : vector<16x8xf32> to vector<16x1x8xf32>
    %9 = vector.broadcast %8 : vector<16x1x8xf32> to vector<16x16x8xf32>
    %10 = arith.mulf %9, %7 : vector<16x16x8xf32>
    %cst_9 = arith.constant dense<0.000000e+00> : vector<16x8xf32>
    %11 = vector.multi_reduction <add>, %10, %cst_9 [0] : vector<16x16x8xf32> to vector<16x8xf32>
    %12 = arith.maximumf %5, %11 : vector<16x8xf32>
    %c0_10 = arith.constant 0 : index
    %c0_11 = arith.constant 0 : index
    %13 = vector.load %arg3[%c0_10, %c0_11] : memref<16x8xf32, #tpu.memory_space<vmem>>, vector<16x8xf32>
    %c0_12 = arith.constant 0 : index
    %c0_13 = arith.constant 0 : index
    %c0_14 = arith.constant 0 : index
    %14 = vector.load %arg6[%c0_12, %c0_13, %c0_14] : memref<16x16x8xf32, #tpu.memory_space<vmem>>, vector<16x16x8xf32>
    %15 = vector.shape_cast %13 : vector<16x8xf32> to vector<16x1x8xf32>
    %16 = vector.broadcast %15 : vector<16x1x8xf32> to vector<16x16x8xf32>
    %17 = arith.mulf %16, %14 : vector<16x16x8xf32>
    %cst_15 = arith.constant dense<0.000000e+00> : vector<16x8xf32>
    %18 = vector.multi_reduction <add>, %17, %cst_15 [0] : vector<16x16x8xf32> to vector<16x8xf32>
    %19 = arith.maximumf %12, %18 : vector<16x8xf32>
    %20 = tpu.iota {dimensions = array<i32: 0>} : vector<16x8xi32>
    %c0_i32 = arith.constant 0 : i32
    %21 = vector.broadcast %c0_i32 : i32 to vector<16x8xi32>
    %22 = arith.cmpi eq, %20, %21 : vector<16x8xi32>
    %cst_16 = arith.constant 0xFF800000 : f32
    %23 = vector.broadcast %cst_16 : f32 to vector<16x8xf32>
    %24 = arith.select %22, %23, %19 : vector<16x8xi1>, vector<16x8xf32>
    %cst_17 = arith.constant dense<0xFF800000> : vector<8xf32>
    %25 = vector.multi_reduction <maximumf>, %24, %cst_17 [0] : vector<16x8xf32> to vector<8xf32>
    %26 = vector.shape_cast %25 : vector<8xf32> to vector<1x8xf32>
    %c0_18 = arith.constant 0 : index
    %c0_19 = arith.constant 0 : index
    %27 = vector.load %arg7[%c0_18, %c0_19] : memref<1x8xf32, #tpu.memory_space<vmem>>, vector<1x8xf32>
    tpu.vector_store %arg7[%c0_18, %c0_19], %26 {strides = array<i32>} : memref<1x8xf32, #tpu.memory_space<vmem>>, vector<1x8xf32>,
    %28 = vector.broadcast %26 : vector<1x8xf32> to vector<16x8xf32>
    %29 = arith.cmpf oeq, %24, %28 : vector<16x8xf32>
    %c16_i32 = arith.constant 16 : i32
    %30 = vector.broadcast %c16_i32 : i32 to vector<16x8xi32>
    %31 = arith.select %29, %20, %30 : vector<16x8xi1>, vector<16x8xi32>
    %cst_20 = arith.constant dense<2147483647> : vector<8xi32>
    %32 = vector.multi_reduction <minsi>, %31, %cst_20 [0] : vector<16x8xi32> to vector<8xi32>
    %33 = vector.shape_cast %32 : vector<8xi32> to vector<1x8xi32>
    %c1_i32 = arith.constant 1 : i32
    %34 = vector.broadcast %c1_i32 : i32 to vector<1x8xi32>
    %35 = arith.subi %33, %34 : vector<1x8xi32>
    %c0_21 = arith.constant 0 : index
    %c0_22 = arith.constant 0 : index
    %36 = vector.load %arg8[%c0_21, %c0_22] : memref<1x8xi32, #tpu.memory_space<vmem>>, vector<1x8xi32>
    tpu.vector_store %arg8[%c0_21, %c0_22], %35 {strides = array<i32>} : memref<1x8xi32, #tpu.memory_space<vmem>>, vector<1x8xi32>,
    return
  }
  func.func @transform_0(%arg0: i32) -> (i32, i32) {
    %c0_i32 = arith.constant 0 : i32
    %c0_i32_0 = arith.constant 0 : i32
    return %c0_i32, %arg0 : i32, i32
  }
  func.func @transform_1(%arg0: i32) -> (i32, i32) {
    %c0_i32 = arith.constant 0 : i32
    %c0_i32_0 = arith.constant 0 : i32
    return %c0_i32, %arg0 : i32, i32
  }
  func.func @transform_2(%arg0: i32) -> (i32, i32) {
    %c0_i32 = arith.constant 0 : i32
    %c0_i32_0 = arith.constant 0 : i32
    return %c0_i32, %arg0 : i32, i32
  }
  func.func @transform_3(%arg0: i32) -> (i32, i32, i32) {
    %c0_i32 = arith.constant 0 : i32
    %c0_i32_0 = arith.constant 0 : i32
    %c0_i32_1 = arith.constant 0 : i32
    return %c0_i32, %c0_i32_0, %arg0 : i32, i32, i32
  }
  func.func @transform_4(%arg0: i32) -> (i32, i32, i32) {
    %c0_i32 = arith.constant 0 : i32
    %c0_i32_0 = arith.constant 0 : i32
    %c0_i32_1 = arith.constant 0 : i32
    return %c0_i32, %c0_i32_0, %arg0 : i32, i32, i32
  }
  func.func @transform_5(%arg0: i32) -> (i32, i32, i32) {
    %c0_i32 = arith.constant 0 : i32
    %c0_i32_0 = arith.constant 0 : i32
    %c0_i32_1 = arith.constant 0 : i32
    return %c0_i32, %c0_i32_0, %arg0 : i32, i32, i32
  }
  func.func @transform_6(%arg0: i32) -> (i32, i32) {
    %c0_i32 = arith.constant 0 : i32
    %c0_i32_0 = arith.constant 0 : i32
    return %c0_i32, %arg0 : i32, i32
  }
  func.func @transform_7(%arg0: i32) -> (i32, i32) {
    %c0_i32 = arith.constant 0 : i32
    %c0_i32_0 = arith.constant 0 : i32
    return %c0_i32, %arg0 : i32, i32
  }
}

</mosaic_0001>

<llo_original>
// kernel: tpu_custom_call.1
$region0: #{tpu_custom_call.1}
  #allocation0 [shape = 'u32[]', space=smem, size = 0x4, offset = 0x4, fixed_abs, tag = 'smem constant byte address 0x4 - core index']
  #allocation1 [shape = 'u32[72,128]{1,0:T(1,128)}', space=vmem, size = 0x9000, scoped, tag = 'internal scratch']
  %s0 = inlined_call_operand.vmem [shape: f32[16,8], index: 0, kind: input, shape index: {}]
  %s1 = inlined_call_operand.vmem [shape: f32[16,8], index: 1, kind: input, shape index: {}]
  %s2 = inlined_call_operand.vmem [shape: f32[16,8], index: 2, kind: input, shape index: {}]
  %s3 = inlined_call_operand.vmem [shape: f32[16,16,8], index: 3, kind: input, shape index: {}]
  %s4 = inlined_call_operand.vmem [shape: f32[16,16,8], index: 4, kind: input, shape index: {}]
  %s5 = inlined_call_operand.vmem [shape: f32[16,16,8], index: 5, kind: input, shape index: {}]
  %s6 = inlined_call_operand.hbm [shape: f32[1,8], index: 6, kind: output, shape index: {0}]
  %s7 = inlined_call_operand.hbm [shape: s32[1,8], index: 7, kind: output, shape index: {1}]
  %8 = xla_tuple %s6, %s7
  %s9 = sld [smem:[#allocation0]]
  $region42: #{tpu_custom_call.1} parent=0
    _
  %s11 = ssub.s32 1, %s9
  %s12 = scalar_select 0, %s11, %s9
  $region1: #{tpu_custom_call.1} parent=0
    #allocation2 [shape = 'u8[512]{0}', space=vmem, size = 0x400, scoped, tag = 'output window, operand 0, single buffered']
    #allocation3 [shape = 's32[1]{0}', space=sflag, size = 0x4, scoped, tag = 'scoped memory for tpu_custom_call.1']
    #allocation4 [shape = 'u8[512]{0}', space=vmem, size = 0x400, scoped, tag = 'output window, operand 1, single buffered']
    #allocation5 [shape = 's32[1]{0}', space=sflag, size = 0x4, scoped, tag = 'scoped memory for tpu_custom_call.1']
    %13 = vsyncpa [#allocation3], 0
    %14 = vsyncpa [#allocation5], 0
    // Predicated region
    $region2: #{tpu_custom_call.1} parent=1 // pred_check
      _
    $region3: #{tpu_custom_call.1} parent=1 // pred_check_branch
      %16 = sbr.rel (0) target = $region5
    $region4: #{tpu_custom_call.1} parent=1 // pred_region
      _
    $region5: #{tpu_custom_call.1} parent=1 // pred_fallthru
      _
    // Predicated region
    $region6: #{tpu_custom_call.1} parent=1 // pred_check
      _
    $region7: #{tpu_custom_call.1} parent=1 // pred_check_branch
      %18 = sbr.rel (0) target = $region9
    $region8: #{tpu_custom_call.1} parent=1 // pred_region
      _
    $region9: #{tpu_custom_call.1} parent=1 // pred_fallthru
      _
    // Predicated region
    $region10: #{tpu_custom_call.1} parent=1 // pred_check
      _
    $region11: #{tpu_custom_call.1} parent=1 // pred_check_branch
      %20 = sbr.rel (0) target = $region13
    $region12: #{tpu_custom_call.1} parent=1 // pred_region
      _
    $region13: #{tpu_custom_call.1} parent=1 // pred_fallthru
      _
    // Predicated region
    $region14: #{tpu_custom_call.1} parent=1 // pred_check
      _
    $region15: #{tpu_custom_call.1} parent=1 // pred_check_branch
      %22 = sbr.rel (0) target = $region17
    $region16: #{tpu_custom_call.1} parent=1 // pred_region
      _
    $region17: #{tpu_custom_call.1} parent=1 // pred_fallthru
      _
    // Predicated region
    $region18: #{tpu_custom_call.1} parent=1 // pred_check
      _
    $region19: #{tpu_custom_call.1} parent=1 // pred_check_branch
      %24 = sbr.rel (0) target = $region21
    $region20: #{tpu_custom_call.1} parent=1 // pred_region
      _
    $region21: #{tpu_custom_call.1} parent=1 // pred_fallthru
      _
    // Predicated region
    $region22: #{tpu_custom_call.1} parent=1 // pred_check
      _
    $region23: #{tpu_custom_call.1} parent=1 // pred_check_branch
      %26 = sbr.rel (0) target = $region25
    $region24: #{tpu_custom_call.1} parent=1 // pred_region
      _
    $region25: #{tpu_custom_call.1} parent=1 // pred_fallthru
      _
    %v27 = vld [vmem:[%s0] sm:$0xff]
    %v28 = vld [vmem:[%s0 + $0x8] sm:$0xff]
    %v29 = vld [vmem:[%s3] sm:$0xff]
    %v30 = vld [vmem:[%s3 + $0x8] sm:$0xff]
    %v31 = vld [vmem:[%s3 + $0x10] sm:$0xff]
    %v32 = vld [vmem:[%s3 + $0x18] sm:$0xff]
    %v33 = vld [vmem:[%s3 + $0x20] sm:$0xff]
    %v34 = vld [vmem:[%s3 + $0x28] sm:$0xff]
    %v35 = vld [vmem:[%s3 + $0x30] sm:$0xff]
    %v36 = vld [vmem:[%s3 + $0x38] sm:$0xff]
    %v37 = vld [vmem:[%s3 + $0x40] sm:$0xff]
    %v38 = vld [vmem:[%s3 + $0x48] sm:$0xff]
    %v39 = vld [vmem:[%s3 + $0x50] sm:$0xff]
    %v40 = vld [vmem:[%s3 + $0x58] sm:$0xff]
    %v41 = vld [vmem:[%s3 + $0x60] sm:$0xff]
    %v42 = vld [vmem:[%s3 + $0x68] sm:$0xff]
    %v43 = vld [vmem:[%s3 + $0x70] sm:$0xff]
    %v44 = vld [vmem:[%s3 + $0x78] sm:$0xff]
    %v45 = vld [vmem:[%s3 + $0x80] sm:$0xff]
    %v46 = vld [vmem:[%s3 + $0x88] sm:$0xff]
    %v47 = vld [vmem:[%s3 + $0x90] sm:$0xff]
    %v48 = vld [vmem:[%s3 + $0x98] sm:$0xff]
    %v49 = vld [vmem:[%s3 + $0xa0] sm:$0xff]
    %v50 = vld [vmem:[%s3 + $0xa8] sm:$0xff]
    %v51 = vld [vmem:[%s3 + $0xb0] sm:$0xff]
    %v52 = vld [vmem:[%s3 + $0xb8] sm:$0xff]
    %v53 = vld [vmem:[%s3 + $0xc0] sm:$0xff]
    %v54 = vld [vmem:[%s3 + $0xc8] sm:$0xff]
    %v55 = vld [vmem:[%s3 + $0xd0] sm:$0xff]
    %v56 = vld [vmem:[%s3 + $0xd8] sm:$0xff]
    %v57 = vld [vmem:[%s3 + $0xe0] sm:$0xff]
    %v58 = vld [vmem:[%s3 + $0xe8] sm:$0xff]
    %v59 = vld [vmem:[%s3 + $0xf0] sm:$0xff]
    %v60 = vld [vmem:[%s3 + $0xf8] sm:$0xff]
    %v63 = vrot.slane %v27, 1
    %v64 = vrot.slane %v27, 2
    %v65 = vrot.slane %v27, 3
    %v66 = vrot.slane %v27, 4
    %v67 = vrot.slane %v27, 5
    %v68 = vrot.slane %v27, 6
    %v69 = vrot.slane %v27, 7
    %v70 = vrot.slane %v28, 1
    %v71 = vrot.slane %v28, 2
    %v72 = vrot.slane %v28, 3
    %v73 = vrot.slane %v28, 4
    %v74 = vrot.slane %v28, 5
    %v75 = vrot.slane %v28, 6
    %v76 = vrot.slane %v28, 7
    %v77 = vperm.slane %v27, 0
    %v78 = vperm.slane %v63, 0
    %v79 = vperm.slane %v64, 0
    %v80 = vperm.slane %v65, 0
    %v81 = vperm.slane %v66, 0
    %v82 = vperm.slane %v67, 0
    %v83 = vperm.slane %v68, 0
    %v84 = vperm.slane %v69, 0
    %v85 = vperm.slane %v28, 0
    %v86 = vperm.slane %v70, 0
    %v87 = vperm.slane %v71, 0
    %v88 = vperm.slane %v72, 0
    %v89 = vperm.slane %v73, 0
    %v90 = vperm.slane %v74, 0
    %v91 = vperm.slane %v75, 0
    %v92 = vperm.slane %v76, 0
    %v109 = vmul.f32 %v77, %v29
    %v110 = vmul.f32 %v77, %v30
    %v111 = vmul.f32 %v78, %v31
    %v112 = vmul.f32 %v78, %v32
    %v113 = vmul.f32 %v79, %v33
    %v114 = vmul.f32 %v79, %v34
    %v115 = vmul.f32 %v80, %v35
    %v116 = vmul.f32 %v80, %v36
    %v117 = vmul.f32 %v81, %v37
    %v118 = vmul.f32 %v81, %v38
    %v119 = vmul.f32 %v82, %v39
    %v120 = vmul.f32 %v82, %v40
    %v121 = vmul.f32 %v83, %v41
    %v122 = vmul.f32 %v83, %v42
    %v123 = vmul.f32 %v84, %v43
    %v124 = vmul.f32 %v84, %v44
    %v125 = vmul.f32 %v85, %v45
    %v126 = vmul.f32 %v85, %v46
    %v127 = vmul.f32 %v86, %v47
    %v128 = vmul.f32 %v86, %v48
    %v129 = vmul.f32 %v87, %v49
    %v130 = vmul.f32 %v87, %v50
    %v131 = vmul.f32 %v88, %v51
    %v132 = vmul.f32 %v88, %v52
    %v133 = vmul.f32 %v89, %v53
    %v134 = vmul.f32 %v89, %v54
    %v135 = vmul.f32 %v90, %v55
    %v136 = vmul.f32 %v90, %v56
    %v137 = vmul.f32 %v91, %v57
    %v138 = vmul.f32 %v91, %v58
    %v139 = vmul.f32 %v92, %v59
    %v140 = vmul.f32 %v92, %v60
    %vm141 = vcmask 64512
    %v142 = vsel %vm141, %v109, 0.0
    %v143 = vsel %vm141, %v111, 0.0
    %v144 = vadd.f32 %v142, %v143
    %v145 = vsel %vm141, %v113, 0.0
    %v146 = vadd.f32 %v144, %v145
    %v147 = vsel %vm141, %v115, 0.0
    %v148 = vadd.f32 %v146, %v147
    %v149 = vsel %vm141, %v117, 0.0
    %v150 = vadd.f32 %v148, %v149
    %v151 = vsel %vm141, %v119, 0.0
    %v152 = vadd.f32 %v150, %v151
    %v153 = vsel %vm141, %v121, 0.0
    %v154 = vadd.f32 %v152, %v153
    %v155 = vsel %vm141, %v123, 0.0
    %v156 = vadd.f32 %v154, %v155
    %v157 = vsel %vm141, %v125, 0.0
    %v158 = vadd.f32 %v156, %v157
    %v159 = vsel %vm141, %v127, 0.0
    %v160 = vadd.f32 %v158, %v159
    %v161 = vsel %vm141, %v129, 0.0
    %v162 = vadd.f32 %v160, %v161
    %v163 = vsel %vm141, %v131, 0.0
    %v164 = vadd.f32 %v162, %v163
    %v165 = vsel %vm141, %v133, 0.0
    %v166 = vadd.f32 %v164, %v165
    %v167 = vsel %vm141, %v135, 0.0
    %v168 = vadd.f32 %v166, %v167
    %v169 = vsel %vm141, %v137, 0.0
    %v170 = vadd.f32 %v168, %v169
    %v171 = vsel %vm141, %v139, 0.0
    %v172 = vadd.f32 %v170, %v171
    %v173 = vsel %vm141, %v110, 0.0
    %v174 = vsel %vm141, %v112, 0.0
    %v175 = vadd.f32 %v173, %v174
    %v176 = vsel %vm141, %v114, 0.0
    %v177 = vadd.f32 %v175, %v176
    %v178 = vsel %vm141, %v116, 0.0
    %v179 = vadd.f32 %v177, %v178
    %v180 = vsel %vm141, %v118, 0.0
    %v181 = vadd.f32 %v179, %v180
    %v182 = vsel %vm141, %v120, 0.0
    %v183 = vadd.f32 %v181, %v182
    %v184 = vsel %vm141, %v122, 0.0
    %v185 = vadd.f32 %v183, %v184
    %v186 = vsel %vm141, %v124, 0.0
    %v187 = vadd.f32 %v185, %v186
    %v188 = vsel %vm141, %v126, 0.0
    %v189 = vadd.f32 %v187, %v188
    %v190 = vsel %vm141, %v128, 0.0
    %v191 = vadd.f32 %v189, %v190
    %v192 = vsel %vm141, %v130, 0.0
    %v193 = vadd.f32 %v191, %v192
    %v194 = vsel %vm141, %v132, 0.0
    %v195 = vadd.f32 %v193, %v194
    %v196 = vsel %vm141, %v134, 0.0
    %v197 = vadd.f32 %v195, %v196
    %v198 = vsel %vm141, %v136, 0.0
    %v199 = vadd.f32 %v197, %v198
    %v200 = vsel %vm141, %v138, 0.0
    %v201 = vadd.f32 %v199, %v200
    %v202 = vsel %vm141, %v140, 0.0
    %v203 = vadd.f32 %v201, %v202
    %v204 = vld [vmem:[%s1] sm:$0xff]
    %v205 = vld [vmem:[%s1 + $0x8] sm:$0xff]
    %v206 = vld [vmem:[%s4] sm:$0xff]
    %v207 = vld [vmem:[%s4 + $0x8] sm:$0xff]
    %v208 = vld [vmem:[%s4 + $0x10] sm:$0xff]
    %v209 = vld [vmem:[%s4 + $0x18] sm:$0xff]
    %v210 = vld [vmem:[%s4 + $0x20] sm:$0xff]
    %v211 = vld [vmem:[%s4 + $0x28] sm:$0xff]
    %v212 = vld [vmem:[%s4 + $0x30] sm:$0xff]
    %v213 = vld [vmem:[%s4 + $0x38] sm:$0xff]
    %v214 = vld [vmem:[%s4 + $0x40] sm:$0xff]
    %v215 = vld [vmem:[%s4 + $0x48] sm:$0xff]
    %v216 = vld [vmem:[%s4 + $0x50] sm:$0xff]
    %v217 = vld [vmem:[%s4 + $0x58] sm:$0xff]
    %v218 = vld [vmem:[%s4 + $0x60] sm:$0xff]
    %v219 = vld [vmem:[%s4 + $0x68] sm:$0xff]
    %v220 = vld [vmem:[%s4 + $0x70] sm:$0xff]
    %v221 = vld [vmem:[%s4 + $0x78] sm:$0xff]
    %v222 = vld [vmem:[%s4 + $0x80] sm:$0xff]
    %v223 = vld [vmem:[%s4 + $0x88] sm:$0xff]
    %v224 = vld [vmem:[%s4 + $0x90] sm:$0xff]
    %v225 = vld [vmem:[%s4 + $0x98] sm:$0xff]
    %v226 = vld [vmem:[%s4 + $0xa0] sm:$0xff]
    %v227 = vld [vmem:[%s4 + $0xa8] sm:$0xff]
    %v228 = vld [vmem:[%s4 + $0xb0] sm:$0xff]
    %v229 = vld [vmem:[%s4 + $0xb8] sm:$0xff]
    %v230 = vld [vmem:[%s4 + $0xc0] sm:$0xff]
    %v231 = vld [vmem:[%s4 + $0xc8] sm:$0xff]
    %v232 = vld [vmem:[%s4 + $0xd0] sm:$0xff]
    %v233 = vld [vmem:[%s4 + $0xd8] sm:$0xff]
    %v234 = vld [vmem:[%s4 + $0xe0] sm:$0xff]
    %v235 = vld [vmem:[%s4 + $0xe8] sm:$0xff]
    %v236 = vld [vmem:[%s4 + $0xf0] sm:$0xff]
    %v237 = vld [vmem:[%s4 + $0xf8] sm:$0xff]
    %v240 = vrot.slane %v204, 1
    %v241 = vrot.slane %v204, 2
    %v242 = vrot.slane %v204, 3
    %v243 = vrot.slane %v204, 4
    %v244 = vrot.slane %v204, 5
    %v245 = vrot.slane %v204, 6
    %v246 = vrot.slane %v204, 7
    %v247 = vrot.slane %v205, 1
    %v248 = vrot.slane %v205, 2
    %v249 = vrot.slane %v205, 3
    %v250 = vrot.slane %v205, 4
    %v251 = vrot.slane %v205, 5
    %v252 = vrot.slane %v205, 6
    %v253 = vrot.slane %v205, 7
    %v254 = vperm.slane %v204, 0
    %v255 = vperm.slane %v240, 0
    %v256 = vperm.slane %v241, 0
    %v257 = vperm.slane %v242, 0
    %v258 = vperm.slane %v243, 0
    %v259 = vperm.slane %v244, 0
    %v260 = vperm.slane %v245, 0
    %v261 = vperm.slane %v246, 0
    %v262 = vperm.slane %v205, 0
    %v263 = vperm.slane %v247, 0
    %v264 = vperm.slane %v248, 0
    %v265 = vperm.slane %v249, 0
    %v266 = vperm.slane %v250, 0
    %v267 = vperm.slane %v251, 0
    %v268 = vperm.slane %v252, 0
    %v269 = vperm.slane %v253, 0
    %v286 = vmul.f32 %v254, %v206
    %v287 = vmul.f32 %v254, %v207
    %v288 = vmul.f32 %v255, %v208
    %v289 = vmul.f32 %v255, %v209
    %v290 = vmul.f32 %v256, %v210
    %v291 = vmul.f32 %v256, %v211
    %v292 = vmul.f32 %v257, %v212
    %v293 = vmul.f32 %v257, %v213
    %v294 = vmul.f32 %v258, %v214
    %v295 = vmul.f32 %v258, %v215
    %v296 = vmul.f32 %v259, %v216
    %v297 = vmul.f32 %v259, %v217
    %v298 = vmul.f32 %v260, %v218
    %v299 = vmul.f32 %v260, %v219
    %v300 = vmul.f32 %v261, %v220
    %v301 = vmul.f32 %v261, %v221
    %v302 = vmul.f32 %v262, %v222
    %v303 = vmul.f32 %v262, %v223
    %v304 = vmul.f32 %v263, %v224
    %v305 = vmul.f32 %v263, %v225
    %v306 = vmul.f32 %v264, %v226
    %v307 = vmul.f32 %v264, %v227
    %v308 = vmul.f32 %v265, %v228
    %v309 = vmul.f32 %v265, %v229
    %v310 = vmul.f32 %v266, %v230
    %v311 = vmul.f32 %v266, %v231
    %v312 = vmul.f32 %v267, %v232
    %v313 = vmul.f32 %v267, %v233
    %v314 = vmul.f32 %v268, %v234
    %v315 = vmul.f32 %v268, %v235
    %v316 = vmul.f32 %v269, %v236
    %v317 = vmul.f32 %v269, %v237
    %v318 = vsel %vm141, %v286, 0.0
    %v319 = vsel %vm141, %v288, 0.0
    %v320 = vadd.f32 %v318, %v319
    %v321 = vsel %vm141, %v290, 0.0
    %v322 = vadd.f32 %v320, %v321
    %v323 = vsel %vm141, %v292, 0.0
    %v324 = vadd.f32 %v322, %v323
    %v325 = vsel %vm141, %v294, 0.0
    %v326 = vadd.f32 %v324, %v325
    %v327 = vsel %vm141, %v296, 0.0
    %v328 = vadd.f32 %v326, %v327
    %v329 = vsel %vm141, %v298, 0.0
    %v330 = vadd.f32 %v328, %v329
    %v331 = vsel %vm141, %v300, 0.0
    %v332 = vadd.f32 %v330, %v331
    %v333 = vsel %vm141, %v302, 0.0
    %v334 = vadd.f32 %v332, %v333
    %v335 = vsel %vm141, %v304, 0.0
    %v336 = vadd.f32 %v334, %v335
    %v337 = vsel %vm141, %v306, 0.0
    %v338 = vadd.f32 %v336, %v337
    %v339 = vsel %vm141, %v308, 0.0
    %v340 = vadd.f32 %v338, %v339
    %v341 = vsel %vm141, %v310, 0.0
    %v342 = vadd.f32 %v340, %v341
    %v343 = vsel %vm141, %v312, 0.0
    %v344 = vadd.f32 %v342, %v343
    %v345 = vsel %vm141, %v314, 0.0
    %v346 = vadd.f32 %v344, %v345
    %v347 = vsel %vm141, %v316, 0.0
    %v348 = vadd.f32 %v346, %v347
    %v349 = vsel %vm141, %v287, 0.0
    %v350 = vsel %vm141, %v289, 0.0
    %v351 = vadd.f32 %v349, %v350
    %v352 = vsel %vm141, %v291, 0.0
    %v353 = vadd.f32 %v351, %v352
    %v354 = vsel %vm141, %v293, 0.0
    %v355 = vadd.f32 %v353, %v354
    %v356 = vsel %vm141, %v295, 0.0
    %v357 = vadd.f32 %v355, %v356
    %v358 = vsel %vm141, %v297, 0.0
    %v359 = vadd.f32 %v357, %v358
    %v360 = vsel %vm141, %v299, 0.0
    %v361 = vadd.f32 %v359, %v360
    %v362 = vsel %vm141, %v301, 0.0
    %v363 = vadd.f32 %v361, %v362
    %v364 = vsel %vm141, %v303, 0.0
    %v365 = vadd.f32 %v363, %v364
    %v366 = vsel %vm141, %v305, 0.0
    %v367 = vadd.f32 %v365, %v366
    %v368 = vsel %vm141, %v307, 0.0
    %v369 = vadd.f32 %v367, %v368
    %v370 = vsel %vm141, %v309, 0.0
    %v371 = vadd.f32 %v369, %v370
    %v372 = vsel %vm141, %v311, 0.0
    %v373 = vadd.f32 %v371, %v372
    %v374 = vsel %vm141, %v313, 0.0
    %v375 = vadd.f32 %v373, %v374
    %v376 = vsel %vm141, %v315, 0.0
    %v377 = vadd.f32 %v375, %v376
    %v378 = vsel %vm141, %v317, 0.0
    %v379 = vadd.f32 %v377, %v378
    %v380 = vmax.f32 %v172, %v348
    %v381 = vmax.f32 %v203, %v379
    %v382 = vld [vmem:[%s2] sm:$0xff]
    %v383 = vld [vmem:[%s2 + $0x8] sm:$0xff]
    %v384 = vld [vmem:[%s5] sm:$0xff]
    %v385 = vld [vmem:[%s5 + $0x8] sm:$0xff]
    %v386 = vld [vmem:[%s5 + $0x10] sm:$0xff]
    %v387 = vld [vmem:[%s5 + $0x18] sm:$0xff]
    %v388 = vld [vmem:[%s5 + $0x20] sm:$0xff]
    %v389 = vld [vmem:[%s5 + $0x28] sm:$0xff]
    %v390 = vld [vmem:[%s5 + $0x30] sm:$0xff]
    %v391 = vld [vmem:[%s5 + $0x38] sm:$0xff]
    %v392 = vld [vmem:[%s5 + $0x40] sm:$0xff]
    %v393 = vld [vmem:[%s5 + $0x48] sm:$0xff]
    %v394 = vld [vmem:[%s5 + $0x50] sm:$0xff]
    %v395 = vld [vmem:[%s5 + $0x58] sm:$0xff]
    %v396 = vld [vmem:[%s5 + $0x60] sm:$0xff]
    %v397 = vld [vmem:[%s5 + $0x68] sm:$0xff]
    %v398 = vld [vmem:[%s5 + $0x70] sm:$0xff]
    %v399 = vld [vmem:[%s5 + $0x78] sm:$0xff]
    %v400 = vld [vmem:[%s5 + $0x80] sm:$0xff]
    %v401 = vld [vmem:[%s5 + $0x88] sm:$0xff]
    %v402 = vld [vmem:[%s5 + $0x90] sm:$0xff]
    %v403 = vld [vmem:[%s5 + $0x98] sm:$0xff]
    %v404 = vld [vmem:[%s5 + $0xa0] sm:$0xff]
    %v405 = vld [vmem:[%s5 + $0xa8] sm:$0xff]
    %v406 = vld [vmem:[%s5 + $0xb0] sm:$0xff]
    %v407 = vld [vmem:[%s5 + $0xb8] sm:$0xff]
    %v408 = vld [vmem:[%s5 + $0xc0] sm:$0xff]
    %v409 = vld [vmem:[%s5 + $0xc8] sm:$0xff]
    %v410 = vld [vmem:[%s5 + $0xd0] sm:$0xff]
    %v411 = vld [vmem:[%s5 + $0xd8] sm:$0xff]
    %v412 = vld [vmem:[%s5 + $0xe0] sm:$0xff]
    %v413 = vld [vmem:[%s5 + $0xe8] sm:$0xff]
    %v414 = vld [vmem:[%s5 + $0xf0] sm:$0xff]
    %v415 = vld [vmem:[%s5 + $0xf8] sm:$0xff]
    %v418 = vrot.slane %v382, 1
    %v419 = vrot.slane %v382, 2
    %v420 = vrot.slane %v382, 3
    %v421 = vrot.slane %v382, 4
    %v422 = vrot.slane %v382, 5
    %v423 = vrot.slane %v382, 6
    %v424 = vrot.slane %v382, 7
    %v425 = vrot.slane %v383, 1
    %v426 = vrot.slane %v383, 2
    %v427 = vrot.slane %v383, 3
    %v428 = vrot.slane %v383, 4
    %v429 = vrot.slane %v383, 5
    %v430 = vrot.slane %v383, 6
    %v431 = vrot.slane %v383, 7
    %v432 = vperm.slane %v382, 0
    %v433 = vperm.slane %v418, 0
    %v434 = vperm.slane %v419, 0
    %v435 = vperm.slane %v420, 0
    %v436 = vperm.slane %v421, 0
    %v437 = vperm.slane %v422, 0
    %v438 = vperm.slane %v423, 0
    %v439 = vperm.slane %v424, 0
    %v440 = vperm.slane %v383, 0
    %v441 = vperm.slane %v425, 0
    %v442 = vperm.slane %v426, 0
    %v443 = vperm.slane %v427, 0
    %v444 = vperm.slane %v428, 0
    %v445 = vperm.slane %v429, 0
    %v446 = vperm.slane %v430, 0
    %v447 = vperm.slane %v431, 0
    %v464 = vmul.f32 %v432, %v384
    %v465 = vmul.f32 %v432, %v385
    %v466 = vmul.f32 %v433, %v386
    %v467 = vmul.f32 %v433, %v387
    %v468 = vmul.f32 %v434, %v388
    %v469 = vmul.f32 %v434, %v389
    %v470 = vmul.f32 %v435, %v390
    %v471 = vmul.f32 %v435, %v391
    %v472 = vmul.f32 %v436, %v392
    %v473 = vmul.f32 %v436, %v393
    %v474 = vmul.f32 %v437, %v394
    %v475 = vmul.f32 %v437, %v395
    %v476 = vmul.f32 %v438, %v396
    %v477 = vmul.f32 %v438, %v397
    %v478 = vmul.f32 %v439, %v398
    %v479 = vmul.f32 %v439, %v399
    %v480 = vmul.f32 %v440, %v400
    %v481 = vmul.f32 %v440, %v401
    %v482 = vmul.f32 %v441, %v402
    %v483 = vmul.f32 %v441, %v403
    %v484 = vmul.f32 %v442, %v404
    %v485 = vmul.f32 %v442, %v405
    %v486 = vmul.f32 %v443, %v406
    %v487 = vmul.f32 %v443, %v407
    %v488 = vmul.f32 %v444, %v408
    %v489 = vmul.f32 %v444, %v409
    %v490 = vmul.f32 %v445, %v410
    %v491 = vmul.f32 %v445, %v411
    %v492 = vmul.f32 %v446, %v412
    %v493 = vmul.f32 %v446, %v413
    %v494 = vmul.f32 %v447, %v414
    %v495 = vmul.f32 %v447, %v415
    %v496 = vsel %vm141, %v464, 0.0
    %v497 = vsel %vm141, %v466, 0.0
    %v498 = vadd.f32 %v496, %v497
    %v499 = vsel %vm141, %v468, 0.0
    %v500 = vadd.f32 %v498, %v499
    %v501 = vsel %vm141, %v470, 0.0
    %v502 = vadd.f32 %v500, %v501
    %v503 = vsel %vm141, %v472, 0.0
    %v504 = vadd.f32 %v502, %v503
    %v505 = vsel %vm141, %v474, 0.0
    %v506 = vadd.f32 %v504, %v505
    %v507 = vsel %vm141, %v476, 0.0
    %v508 = vadd.f32 %v506, %v507
    %v509 = vsel %vm141, %v478, 0.0
    %v510 = vadd.f32 %v508, %v509
    %v511 = vsel %vm141, %v480, 0.0
    %v512 = vadd.f32 %v510, %v511
    %v513 = vsel %vm141, %v482, 0.0
    %v514 = vadd.f32 %v512, %v513
    %v515 = vsel %vm141, %v484, 0.0
    %v516 = vadd.f32 %v514, %v515
    %v517 = vsel %vm141, %v486, 0.0
    %v518 = vadd.f32 %v516, %v517
    %v519 = vsel %vm141, %v488, 0.0
    %v520 = vadd.f32 %v518, %v519
    %v521 = vsel %vm141, %v490, 0.0
    %v522 = vadd.f32 %v520, %v521
    %v523 = vsel %vm141, %v492, 0.0
    %v524 = vadd.f32 %v522, %v523
    %v525 = vsel %vm141, %v494, 0.0
    %v526 = vadd.f32 %v524, %v525
    %v527 = vsel %vm141, %v465, 0.0
    %v528 = vsel %vm141, %v467, 0.0
    %v529 = vadd.f32 %v527, %v528
    %v530 = vsel %vm141, %v469, 0.0
    %v531 = vadd.f32 %v529, %v530
    %v532 = vsel %vm141, %v471, 0.0
    %v533 = vadd.f32 %v531, %v532
    %v534 = vsel %vm141, %v473, 0.0
    %v535 = vadd.f32 %v533, %v534
    %v536 = vsel %vm141, %v475, 0.0
    %v537 = vadd.f32 %v535, %v536
    %v538 = vsel %vm141, %v477, 0.0
    %v539 = vadd.f32 %v537, %v538
    %v540 = vsel %vm141, %v479, 0.0
    %v541 = vadd.f32 %v539, %v540
    %v542 = vsel %vm141, %v481, 0.0
    %v543 = vadd.f32 %v541, %v542
    %v544 = vsel %vm141, %v483, 0.0
    %v545 = vadd.f32 %v543, %v544
    %v546 = vsel %vm141, %v485, 0.0
    %v547 = vadd.f32 %v545, %v546
    %v548 = vsel %vm141, %v487, 0.0
    %v549 = vadd.f32 %v547, %v548
    %v550 = vsel %vm141, %v489, 0.0
    %v551 = vadd.f32 %v549, %v550
    %v552 = vsel %vm141, %v491, 0.0
    %v553 = vadd.f32 %v551, %v552
    %v554 = vsel %vm141, %v493, 0.0
    %v555 = vadd.f32 %v553, %v554
    %v556 = vsel %vm141, %v495, 0.0
    %v557 = vadd.f32 %v555, %v556
    %v558 = vmax.f32 %v380, %v526
    %v559 = vmax.f32 %v381, %v557
    %v560 = vlaneseq
    %v561 = vshrl.u32 %v560, 7
    %v562 = vadd.s32 %v561, 8
    %vm563 = vcmp.eq.s32.totalorder %v561, 0
    %vm564 = vcmp.eq.s32.totalorder %v562, 0
    %v565 = vsel %vm563, -inf, %v558
    %v566 = vsel %vm564, -inf, %v559
    %v567 = vsel %vm141, %v565, -inf
    %v568 = vsel %vm141, %v566, -inf
    %v569 = vmax.f32 %v567, %v568
    %v570 = vrot.slane %v569, 4
    %v571 = vmax.f32 %v569, %v570
    %v572 = vrot.slane %v571, 2
    %v573 = vmax.f32 %v571, %v572
    %v574 = vrot.slane %v573, 1
    %v575 = vmax.f32 %v573, %v574
    %vm576 = vcmask 57344
    %577 = vst.msk [vmem:[#allocation2] sm:$0x1] %vm576, %v575
    %vm578 = vcmp.eq.f32.partialorder %v565, %v575
    %vm579 = vcmp.eq.f32.partialorder %v566, %v575
    %v580 = vsel %vm578, %v561, 16
    %v581 = vsel %vm579, %v562, 16
    %v582 = vsel %vm141, %v580, 2147483647
    %v583 = vsel %vm141, %v581, 2147483647
    %vm584 = vcmp.lt.s32.totalorder %v582, %v583
    %v585 = vsel %vm584, %v582, %v583
    %v586 = vrot.slane %v585, 4
    %vm587 = vcmp.lt.s32.totalorder %v585, %v586
    %v588 = vsel %vm587, %v585, %v586
    %v589 = vrot.slane %v588, 2
    %vm590 = vcmp.lt.s32.totalorder %v588, %v589
    %v591 = vsel %vm590, %v588, %v589
    %v592 = vrot.slane %v591, 1
    %vm593 = vcmp.lt.s32.totalorder %v591, %v592
    %v594 = vsel %vm593, %v591, %v592
    %v595 = vsub.s32 %v594, 1
    %596 = vst.msk [vmem:[#allocation4] sm:$0x1] %vm576, %v595
    // Predicated region
    $region26: #{tpu_custom_call.1} parent=1 // pred_check
      _
    $region27: #{tpu_custom_call.1} parent=1 // pred_check_branch
      %598 = sbr.rel (0) target = $region29
    $region28: #{tpu_custom_call.1} parent=1 // pred_region
      %600 = vsyncadd [#allocation3], 0
      %s602 = sshll.u32 [#allocation2], 4
      %s603 = int_to_ptr.vmem [resolvable:$true] %s602
      %s604 = sshll.u32 %s6, 4
      %s605 = int_to_ptr.hbm [resolvable:$true] %s604
      %607 = dma.vmem_to_hbm [thread:$0]  %s603, 16, %s605, [#allocation3]
    $region29: #{tpu_custom_call.1} parent=1 // pred_fallthru
      _
    // Predicated region
    $region30: #{tpu_custom_call.1} parent=1 // pred_check
      _
    $region31: #{tpu_custom_call.1} parent=1 // pred_check_branch
      %609 = sbr.rel (0) target = $region33
    $region32: #{tpu_custom_call.1} parent=1 // pred_region
      %611 = vsyncadd [#allocation5], 0
      %s613 = sshll.u32 [#allocation4], 4
      %s614 = int_to_ptr.vmem [resolvable:$true] %s613
      %s615 = sshll.u32 %s7, 4
      %s616 = int_to_ptr.hbm [resolvable:$true] %s615
      %618 = dma.vmem_to_hbm [thread:$0]  %s614, 16, %s616, [#allocation5]
    $region33: #{tpu_custom_call.1} parent=1 // pred_fallthru
      _
    // Predicated region
    $region34: #{tpu_custom_call.1} parent=1 // pred_check
      _
    $region35: #{tpu_custom_call.1} parent=1 // pred_check_branch
      %620 = sbr.rel (0) target = $region37
    $region36: #{tpu_custom_call.1} parent=1 // pred_region
      %622 = dma.done [#allocation3], 16
    $region37: #{tpu_custom_call.1} parent=1 // pred_fallthru
      _
    // Predicated region
    $region38: #{tpu_custom_call.1} parent=1 // pred_check
      _
    $region39: #{tpu_custom_call.1} parent=1 // pred_check_branch
      %624 = sbr.rel (0) target = $region41
    $region40: #{tpu_custom_call.1} parent=1 // pred_region
      %626 = dma.done [#allocation5], 16
    $region41: #{tpu_custom_call.1} parent=1 // pred_fallthru
      _
    %627 = vsyncpa [#allocation3], 1
    %628 = vsyncpa [#allocation5], 1

</llo_original>
